<compile_context>
chip_gen: v7x
topology: tpu7x:2x2x1
jax: 0.10.0
libtpu: 0.0.40
codegen_flags: <defaults>
</compile_context>

<pallas_src>
import functools

import jax
import jax.numpy as jnp
from jax.experimental import pallas as pl
from jax.experimental.pallas import tpu as pltpu

# ---------------------------------------------------------------------------
# Deterministic stand-ins for the external `args` object.
# (pSkipLayer's forward never calls ACT / INV.)
# ---------------------------------------------------------------------------
GMIN = 0.01            # args.gmin
GMAX = 10.0            # args.gmax
PGMIN = 1e-4           # args.pgmin

# bf16 MXU operands (f32 accumulation): ~3x MXU throughput on v5e/v6e/v7x and
# half the activation/weight HBM stream.  Set to jnp.float32 for strict parity
# with the literal torch f32 semantics (and tighten the tolerances below).
MATMUL_DTYPE = jnp.bfloat16


def _vmem_capacity_bytes():
    try:
        info = pltpu.get_tpu_info()
        cap = getattr(info, "vmem_capacity_bytes", None)
        if cap:
            return int(cap)
    except Exception:
        pass
    return 64 * 1024 * 1024  # conservative default (v7x per-core VMEM)


_VMEM_CAPACITY = _vmem_capacity_bytes()
# 96 MiB scoped on v5e/v6e (128 MiB physical), 48 MiB on v7x (64 MiB physical).
_VMEM_BUDGET = min(int(_VMEM_CAPACITY * 3 // 4), 96 * 1024 * 1024)


def _round_up(x, m):
    return ((x + m - 1) // m) * m


def _cdiv(a, b):
    return -(-a // b)


def _buffered(n):
    buffered = getattr(pl, "Buffered", None)
    return buffered(n) if buffered is not None else None


def _block_spec(shape, index_map, *, mode=None, memory_space=None):
    kwargs = {}
    if memory_space is not None:
        kwargs["memory_space"] = memory_space
    if mode is not None:
        try:
            return pl.BlockSpec(shape, index_map, pipeline_mode=mode, **kwargs)
        except TypeError:      # jax build without BlockSpec.pipeline_mode
            pass
    return pl.BlockSpec(shape, index_map, **kwargs)


# ---------------------------------------------------------------------------
# Parameter construction / "properties" (batch-invariant glue, plain JAX).
# Hoisted out of the kernel: they depend only on theta, not on the batch.
# ---------------------------------------------------------------------------
def init_theta(key, n_in, n_out):
    # pSkipLayer.__init__: theta = rand(n_in, n_out)/100 + gmin
    return jax.random.uniform(key, (n_in, n_out), jnp.float32) / 100.0 + GMIN


def effective_theta(theta_):
    # pSkipLayer.theta property: clamp to [0, gmax], zero out |theta| < gmin
    th = jnp.clip(theta_, 0.0, GMAX)
    return jnp.where(jnp.abs(th) < GMIN, 0.0, th)


def weight_W(theta):
    # pLayer.W property (inherited): column-normalized |theta|, all-zero cols -> 0
    abs_t = jnp.abs(theta)
    col_sum = jnp.sum(abs_t, axis=0, keepdims=True)
    surrogate = jnp.where(col_sum == 0.0, 0.0, abs_t)
    W = jnp.abs(surrogate) / jnp.sum(surrogate, axis=0, keepdims=True)
    return jnp.where(jnp.isnan(W), 0.0, W)


def g_tilde(theta_):
    # pSkipLayer.g_tilde property (uses the RAW parameter, mirroring torch).
    # Precondition (same as torch): no column of theta_ has min|.| == 0,
    # otherwise inf/NaN propagates into the power term exactly as in torch.
    g_init = jnp.abs(theta_)
    g_min = jnp.min(g_init, axis=0, keepdims=True)
    return g_init * (PGMIN / g_min)


# ---------------------------------------------------------------------------
# Pallas kernel.  Grid = (batch tiles, n_in chunks).
# ---------------------------------------------------------------------------
def pskip_kernel(x_ref, wg_ref, grow_ref, gcol_ref, z_ref, pw_ref,
                 acc_ref, pw_acc_ref):
    """
    x_ref      : (TE, TM)    bf16 activation tile               (streamed)
    wg_ref     : (TM, 2*Np)  bf16 packed [W | G] chunk          (resident if num_k==1)
    grow_ref   : (1, TM)     f32 row-sums of G chunk (over n)
    gcol_ref   : (1, Np)     f32 col-sums of G (over m)         (resident)
    z_ref      : (TE, Np)    f32 lane-dense z output (written at last k)
    pw_ref     : (1, 1) SMEM f32 un-normalized power partial for this batch tile
    acc_ref    : (TE, 2*Np)  f32 VMEM [z | x@G] accumulator across k
    pw_acc_ref : (1, 1) SMEM f32 term_a accumulator across k
    """
    k = pl.program_id(1)

    @pl.when(k == 0)
    def _init():
        acc_ref[...] = jnp.zeros_like(acc_ref)
        pw_acc_ref[0, 0] = jnp.float32(0.0)

    x = x_ref[...]
    # One MXU push per step: [z | x@G] += x @ [W | G]
    acc_ref[...] += jnp.dot(x, wg_ref[...], preferred_element_type=jnp.float32)

    # term_a partial: sum_e sum_m x^2 * grow  (sublane-first reduction:
    # TE*M squares, then only M broadcast-multiplies).
    xf = x.astype(jnp.float32)
    pw_acc_ref[0, 0] += jnp.sum(
        jnp.sum(xf * xf, axis=0, keepdims=True) * grow_ref[...])

    @pl.when(k == pl.num_programs(1) - 1)
    def _finalize():
        np_ = z_ref.shape[-1]
        zz = acc_ref[...]
        z = zz[:, :np_]
        xg = zz[:, np_:]
        z_ref[...] = z.astype(z_ref.dtype)
        # Fused term_b + term_c: one elementwise pass, one reduction.
        pw_ref[0, 0] = pw_acc_ref[0, 0] + jnp.sum(
            z * (gcol_ref[...] * z - 2.0 * xg))


# ---------------------------------------------------------------------------
# Wrapper (forward pass of pSkipLayer): returns (z_padded, mac_power)
# ---------------------------------------------------------------------------
@functools.partial(jax.jit, static_argnames=("wg_resident_limit_bytes",))
def pskip_forward(a_previous, theta_, *, wg_resident_limit_bytes=None):
    """Forward pass of pSkipLayer.

    Returns (z_padded, power):
      z_padded : (E_pad, Np) f32, lane/sublane-padded MAC output.  The valid
                 region is z_padded[:E, :n_out]; it is returned padded so the
                 hot path never pays an extra HBM copy just to strip padding.
      power    : scalar MAC_power (normalized by the true batch size).
    """
    theta = effective_theta(theta_)
    W = weight_W(theta)
    G = g_tilde(theta_)

    E, M = a_previous.shape
    N = theta.shape[1]
    Np = _round_up(N, 128)                       # lane-dense output width
    item = jnp.dtype(MATMUL_DTYPE).itemsize

    if wg_resident_limit_bytes is None:
        wg_resident_limit_bytes = min(16 * 1024 * 1024, _VMEM_BUDGET // 3)

    # --- n_in (contraction) tiling: keep packed [W|G] within budget (v7x) ---
    wg_row_bytes = 2 * Np * item
    if M * wg_row_bytes <= wg_resident_limit_bytes:
        tile_m, M_pad, num_k = M, M, 1
    else:
        tile_m = max(128,
                     (wg_resident_limit_bytes // (2 * wg_row_bytes)) // 128 * 128)
        M_pad = _round_up(M, tile_m)
        num_k = M_pad // tile_m

    # --- batch-invariant operands (quantized ONCE in the wrapper; grow/gcol
    #     derived from the quantized G so the expansion stays self-consistent)
    pad_n = ((0, 0), (0, Np - N))
    pad_m = ((0, M_pad - M), (0, 0))
    W_q = W.astype(MATMUL_DTYPE)
    G_q = G.astype(MATMUL_DTYPE)
    G_f = G_q.astype(jnp.float32)
    WG = jnp.pad(jnp.concatenate([jnp.pad(W_q, pad_n), jnp.pad(G_q, pad_n)],
                                 axis=1), pad_m)                 # (M_pad, 2*Np)
    grow = jnp.pad(jnp.sum(G_f, axis=1)[None, :], ((0, 0), (0, M_pad - M)))
    gcol = jnp.pad(jnp.sum(G_f, axis=0, keepdims=True), pad_n)

    # --- batch tiling: balanced tiles, >=2 tiles when possible (v7x dual TC),
    #     sized so all buffers fit the scoped VMEM budget ---------------------
    wg_bufs = 1 if num_k == 1 else 2
    per_row_bytes = tile_m * item * 3 + Np * 4 * 2 + 2 * Np * 4  # x(<=3) + z(2) + acc
    avail = _VMEM_BUDGET - wg_bufs * tile_m * wg_row_bytes - (2 << 20)
    tile_e_max = max(8, min(1024, (avail // per_row_bytes) // 8 * 8))

    min_tiles = 2 if E >= 16 else 1
    n_goal = max(min_tiles, _cdiv(E, tile_e_max))
    tile_e = min(tile_e_max, _round_up(_cdiv(E, n_goal), 8))
    E_pad = _round_up(E, tile_e)
    num_e = E_pad // tile_e

    # Zero-padded rows/cols are inert: they add nothing to z or to the power.
    x = jnp.pad(a_previous.astype(MATMUL_DTYPE),
                ((0, E_pad - E), (0, M_pad - M)))

    # Invariant operands single-buffered; activations 3-deep when grid is long.
    x_mode = _buffered(3) if num_e * num_k >= 3 else None
    wg_mode = _buffered(1) if num_k == 1 else None
    gcol_mode = _buffered(1)

    flops = 2 * E_pad * M_pad * 2 * Np + 6 * E_pad * (M_pad + Np)
    bytes_accessed = (E_pad * M_pad * item + M_pad * 2 * Np * item
                      + E_pad * Np * 4 + (M_pad + Np + num_e) * 4)

    z_pad, pw_parts = pl.pallas_call(
        pskip_kernel,
        grid=(num_e, num_k),
        out_shape=(
            jax.ShapeDtypeStruct((E_pad, Np), jnp.float32),
            jax.ShapeDtypeStruct((num_e, 1), jnp.float32),
        ),
        in_specs=[
            _block_spec((tile_e, tile_m), lambda i, k: (i, k), mode=x_mode),
            _block_spec((tile_m, 2 * Np), lambda i, k: (k, 0), mode=wg_mode),
            _block_spec((1, tile_m), lambda i, k: (0, k), mode=wg_mode),
            _block_spec((1, Np), lambda i, k: (0, 0), mode=gcol_mode),
        ],
        out_specs=(
            pl.BlockSpec((tile_e, Np), lambda i, k: (i, 0)),
            pl.BlockSpec((1, 1), lambda i, k: (i, 0),
                         memory_space=pltpu.MemorySpace.SMEM),
        ),
        scratch_shapes=[
            pltpu.VMEM((tile_e, 2 * Np), jnp.float32),   # [z | x@G] accumulator
            pltpu.SMEM((1, 1), jnp.float32),             # term_a accumulator
        ],
        compiler_params=pltpu.CompilerParams(
            dimension_semantics=("parallel", "arbitrary"),
            vmem_limit_bytes=_VMEM_BUDGET,
        ),
        cost_estimate=pl.CostEstimate(
            flops=int(flops), transcendentals=0,
            bytes_accessed=int(bytes_accessed)),
    )(x, WG, grow, gcol)

    # Normalize by the TRUE batch size (padded rows contribute exactly 0).
    power = jnp.sum(pw_parts) / E
    return z_pad, power


# ---------------------------------------------------------------------------
if __name__ == "__main__":
    key = jax.random.PRNGKey(0)
    k_theta, k_a, k_theta2, k_a2 = jax.random.split(key, 4)

    def reference(a, theta_):
        # Pure-JAX reference of the literal pSkipLayer MAC / MAC_power (f32).
        theta = effective_theta(theta_)
        W = weight_W(theta)
        G = g_tilde(theta_)
        z_ref = a @ W
        diff = a[:, :, None] - z_ref[:, None, :]        # (E, M, N)
        power_ref = jnp.sum(G[None] * diff ** 2) / a.shape[0]
        return z_ref, power_ref

    # ---- primary small case ------------------------------------------------
    n_in, n_out, batch = 16, 8, 8
    theta_ = init_theta(k_theta, n_in, n_out)
    a = jax.random.uniform(k_a, (batch, n_in), jnp.float32)

    z_pad, power = pskip_forward(a, theta_)
    jax.block_until_ready((z_pad, power))
    z = z_pad[:batch, :n_out]      # verification-only slice; padded slab is the perf path

    z_ref, power_ref = reference(a, theta_)
    # bf16 MXU operands -> loosened (but still tight in absolute terms) checks.
    assert jnp.allclose(z, z_ref, atol=5e-3, rtol=5e-3), "MAC mismatch"
    assert jnp.allclose(power, power_ref, rtol=5e-2, atol=1e-5), "MAC_power mismatch"

    # ---- exercise the n_in-tiled path (v7x resident-weight guard) ----------
    n_in2, n_out2, batch2 = 256, 8, 32
    theta2_ = init_theta(k_theta2, n_in2, n_out2)
    a2 = jax.random.uniform(k_a2, (batch2, n_in2), jnp.float32)
    z2_pad, power2 = pskip_forward(a2, theta2_, wg_resident_limit_bytes=1)
    jax.block_until_ready((z2_pad, power2))
    z2_ref, power2_ref = reference(a2, theta2_)
    assert jnp.allclose(z2_pad[:batch2, :n_out2], z2_ref,
                        atol=5e-3, rtol=5e-3), "MAC mismatch (tiled n_in)"
    assert jnp.allclose(power2, power2_ref,
                        rtol=5e-2, atol=1e-5), "MAC_power mismatch (tiled n_in)"

    # TODO(synk): soft_num_theta / soft_num_act / soft_num_neg are regularizer
    # bookkeeping (and the detach straight-through tricks are gradient-only);
    # they are not part of forward() and are intentionally not implemented.
    print("KERNEL_OK")
</pallas_src>

<mosaic_0001>
module attributes {stable_mosaic.version = 11 : i64} {
  func.func @pskip_kernel(%arg0: i32, %arg1: i32, %arg2: memref<8x16xbf16, #tpu.memory_space<vmem>>, %arg3: memref<16x256xbf16, #tpu.memory_space<vmem>>, %arg4: memref<1x16xf32, #tpu.memory_space<vmem>>, %arg5: memref<1x128xf32, #tpu.memory_space<vmem>>, %arg6: memref<8x128xf32, #tpu.memory_space<vmem>>, %arg7: memref<1x1xf32, #tpu.memory_space<smem>>, %arg8: memref<8x256xf32, #tpu.memory_space<vmem>>, %arg9: memref<1x1xf32, #tpu.memory_space<smem>>) attributes {dimension_semantics = [#tpu.dimension_semantics<parallel>, #tpu.dimension_semantics<arbitrary>], iteration_bounds = array<i64: 1, 1>, scalar_prefetch = 0 : i64, scratch_operands = 2 : i64, tpu.core_type = #tpu.core_type<tc>, window_params = [{transform_indices = @transform_0, window_bounds = array<i64: 8, 16>}, {pipeline_mode = #tpu.pipeline_mode<synchronous>, transform_indices = @transform_1, window_bounds = array<i64: 16, 256>}, {pipeline_mode = #tpu.pipeline_mode<synchronous>, transform_indices = @transform_2, window_bounds = array<i64: 1, 16>}, {pipeline_mode = #tpu.pipeline_mode<synchronous>, transform_indices = @transform_3, window_bounds = array<i64: 1, 128>}, {transform_indices = @transform_4, window_bounds = array<i64: 8, 128>}, {transform_indices = @transform_5, window_bounds = array<i64: 1, 1>}]} {
    %c0_i32 = arith.constant 0 : i32
    %0 = arith.cmpi eq, %arg1, %c0_i32 : i32
    %1 = arith.extui %0 : i1 to i32
    %c0_i32_0 = arith.constant 0 : i32
    %2 = arith.cmpi ne, %1, %c0_i32_0 : i32
    scf.if %2 {
      %cst_18 = arith.constant 0.000000e+00 : f32
      %25 = vector.broadcast %cst_18 : f32 to vector<8x256xf32>
      %c0_19 = arith.constant 0 : index
      %c0_20 = arith.constant 0 : index
      %26 = vector.load %arg8[%c0_19, %c0_20] : memref<8x256xf32, #tpu.memory_space<vmem>>, vector<8x256xf32>
      tpu.vector_store %arg8[%c0_19, %c0_20], %25 {strides = array<i32>} : memref<8x256xf32, #tpu.memory_space<vmem>>, vector<8x256xf32>,
      %cst_21 = arith.constant 0.000000e+00 : f32
      %c0_22 = arith.constant 0 : index
      %c0_23 = arith.constant 0 : index
      %27 = memref.load %arg9[%c0_22, %c0_23] : memref<1x1xf32, #tpu.memory_space<smem>>
      memref.store %cst_21, %arg9[%c0_22, %c0_23] : memref<1x1xf32, #tpu.memory_space<smem>>
    } else {
    }
    %c0 = arith.constant 0 : index
    %c0_1 = arith.constant 0 : index
    %3 = vector.load %arg2[%c0, %c0_1] : memref<8x16xbf16, #tpu.memory_space<vmem>>, vector<8x16xbf16>
    %c0_2 = arith.constant 0 : index
    %c0_3 = arith.constant 0 : index
    %4 = vector.load %arg8[%c0_2, %c0_3] : memref<8x256xf32, #tpu.memory_space<vmem>>, vector<8x256xf32>
    %c0_4 = arith.constant 0 : index
    %c0_5 = arith.constant 0 : index
    %5 = vector.load %arg3[%c0_4, %c0_5] : memref<16x256xbf16, #tpu.memory_space<vmem>>, vector<16x256xbf16>
    %cst = arith.constant dense<0.000000e+00> : vector<8x256xf32>
    %6 = tpu.matmul %3, %5, %cst {dimension_numbers = #tpu.dot_dimension_numbers<[1], [0], [0], [1], [0, 0, 1, 1], [], []>} : vector<8x16xbf16>, vector<16x256xbf16>, vector<8x256xf32> -> vector<8x256xf32>
    %7 = arith.addf %4, %6 : vector<8x256xf32>
    %c0_6 = arith.constant 0 : index
    %c0_7 = arith.constant 0 : index
    %8 = vector.load %arg8[%c0_6, %c0_7] : memref<8x256xf32, #tpu.memory_space<vmem>>, vector<8x256xf32>
    tpu.vector_store %arg8[%c0_6, %c0_7], %7 {strides = array<i32>} : memref<8x256xf32, #tpu.memory_space<vmem>>, vector<8x256xf32>,
    %9 = arith.extf %3 : vector<8x16xbf16> to vector<8x16xf32>
    %c0_8 = arith.constant 0 : index
    %c0_9 = arith.constant 0 : index
    %10 = memref.load %arg9[%c0_8, %c0_9] : memref<1x1xf32, #tpu.memory_space<smem>>
    %11 = arith.mulf %9, %9 : vector<8x16xf32>
    %cst_10 = arith.constant dense<0.000000e+00> : vector<16xf32>
    %12 = vector.multi_reduction <add>, %11, %cst_10 [0] : vector<8x16xf32> to vector<16xf32>
    %13 = vector.shape_cast %12 : vector<16xf32> to vector<1x16xf32>
    %c0_11 = arith.constant 0 : index
    %c0_12 = arith.constant 0 : index
    %14 = vector.load %arg4[%c0_11, %c0_12] : memref<1x16xf32, #tpu.memory_space<vmem>>, vector<1x16xf32>
    %15 = arith.mulf %13, %14 : vector<1x16xf32>
    %16 = vector.shape_cast %15 : vector<1x16xf32> to vector<1x1x16xf32>
    %cst_13 = arith.constant dense<0.000000e+00> : vector<1xf32>
    %17 = vector.multi_reduction <add>, %16, %cst_13 [1, 2] : vector<1x1x16xf32> to vector<1xf32>
    %18 = vector.shape_cast %17 : vector<1xf32> to vector<1x1x1xf32>
    %19 = vector.extract %18[0, 0, 0] : f32 from vector<1x1x1xf32>
    %20 = arith.addf %10, %19 : f32
    %c0_14 = arith.constant 0 : index
    %c0_15 = arith.constant 0 : index
    %21 = memref.load %arg9[%c0_14, %c0_15] : memref<1x1xf32, #tpu.memory_space<smem>>
    memref.store %20, %arg9[%c0_14, %c0_15] : memref<1x1xf32, #tpu.memory_space<smem>>
    %c0_i32_16 = arith.constant 0 : i32
    %22 = arith.cmpi eq, %arg1, %c0_i32_16 : i32
    %23 = arith.extui %22 : i1 to i32
    %c0_i32_17 = arith.constant 0 : i32
    %24 = arith.cmpi ne, %23, %c0_i32_17 : i32
    scf.if %24 {
      %c0_18 = arith.constant 0 : index
      %c0_19 = arith.constant 0 : index
      %25 = vector.load %arg8[%c0_18, %c0_19] : memref<8x256xf32, #tpu.memory_space<vmem>>, vector<8x256xf32>
      %26 = vector.extract_strided_slice %25 {offsets = [0, 0], sizes = [8, 128], strides = [1, 1]} : vector<8x256xf32> to vector<8x128xf32>
      %27 = vector.extract_strided_slice %25 {offsets = [0, 128], sizes = [8, 128], strides = [1, 1]} : vector<8x256xf32> to vector<8x128xf32>
      %c0_20 = arith.constant 0 : index
      %c0_21 = arith.constant 0 : index
      %28 = vector.load %arg6[%c0_20, %c0_21] : memref<8x128xf32, #tpu.memory_space<vmem>>, vector<8x128xf32>
      tpu.vector_store %arg6[%c0_20, %c0_21], %26 {strides = array<i32>} : memref<8x128xf32, #tpu.memory_space<vmem>>, vector<8x128xf32>,
      %c0_22 = arith.constant 0 : index
      %c0_23 = arith.constant 0 : index
      %29 = memref.load %arg9[%c0_22, %c0_23] : memref<1x1xf32, #tpu.memory_space<smem>>
      %c0_24 = arith.constant 0 : index
      %c0_25 = arith.constant 0 : index
      %30 = vector.load %arg5[%c0_24, %c0_25] : memref<1x128xf32, #tpu.memory_space<vmem>>, vector<1x128xf32>
      %31 = vector.broadcast %30 : vector<1x128xf32> to vector<8x128xf32>
      %32 = arith.mulf %31, %26 : vector<8x128xf32>
      %cst_26 = arith.constant 2.000000e+00 : f32
      %33 = vector.broadcast %cst_26 : f32 to vector<8x128xf32>
      %34 = arith.mulf %33, %27 : vector<8x128xf32>
      %35 = arith.subf %32, %34 : vector<8x128xf32>
      %36 = arith.mulf %26, %35 : vector<8x128xf32>
      %37 = vector.shape_cast %36 : vector<8x128xf32> to vector<1x8x128xf32>
      %cst_27 = arith.constant dense<0.000000e+00> : vector<1xf32>
      %38 = vector.multi_reduction <add>, %37, %cst_27 [1, 2] : vector<1x8x128xf32> to vector<1xf32>
      %39 = vector.shape_cast %38 : vector<1xf32> to vector<1x1x1xf32>
      %40 = vector.extract %39[0, 0, 0] : f32 from vector<1x1x1xf32>
      %41 = arith.addf %29, %40 : f32
      %c0_28 = arith.constant 0 : index
      %c0_29 = arith.constant 0 : index
      %42 = memref.load %arg7[%c0_28, %c0_29] : memref<1x1xf32, #tpu.memory_space<smem>>
      memref.store %41, %arg7[%c0_28, %c0_29] : memref<1x1xf32, #tpu.memory_space<smem>>
    } else {
    }
    return
  }
  func.func @transform_0(%arg0: i32, %arg1: i32) -> (i32, i32) {
    %c0_i32 = arith.constant 0 : i32
    return %arg0, %arg1 : i32, i32
  }
  func.func @transform_1(%arg0: i32, %arg1: i32) -> (i32, i32) {
    %c0_i32 = arith.constant 0 : i32
    %c0_i32_0 = arith.constant 0 : i32
    return %arg1, %c0_i32 : i32, i32
  }
  func.func @transform_2(%arg0: i32, %arg1: i32) -> (i32, i32) {
    %c0_i32 = arith.constant 0 : i32
    %c0_i32_0 = arith.constant 0 : i32
    return %c0_i32, %arg1 : i32, i32
  }
  func.func @transform_3(%arg0: i32, %arg1: i32) -> (i32, i32) {
    %c0_i32 = arith.constant 0 : i32
    %c0_i32_0 = arith.constant 0 : i32
    %c0_i32_1 = arith.constant 0 : i32
    return %c0_i32, %c0_i32_0 : i32, i32
  }
  func.func @transform_4(%arg0: i32, %arg1: i32) -> (i32, i32) {
    %c0_i32 = arith.constant 0 : i32
    %c0_i32_0 = arith.constant 0 : i32
    return %arg0, %c0_i32 : i32, i32
  }
  func.func @transform_5(%arg0: i32, %arg1: i32) -> (i32, i32) {
    %c0_i32 = arith.constant 0 : i32
    %c0_i32_0 = arith.constant 0 : i32
    return %arg0, %c0_i32 : i32, i32
  }
}

</mosaic_0001>

<llo_original>
// kernel: pskip_forward.1
$region0: #{pskip_forward.1}
  #allocation0 [shape = 'u32[]', space=smem, size = 0x4, offset = 0x4, fixed_abs, tag = 'smem constant byte address 0x4 - core index']
  #allocation1 [shape = 'u32[144,128]{1,0:T(1,128)}', space=vmem, size = 0x12000, scoped, tag = 'internal scratch']
  #allocation2 [shape = 'f32[8,256]{1,0:T(8,128)}', space=vmem, size = 0x2000, scoped, tag = 'scratch operand']
  #allocation3 [shape = 'f32[1,1]{1,0:T(1,128)}', space=smem, size = 0x200, scoped, tag = 'scratch operand']
  %s0 = inlined_call_operand.vmem [shape: bf16[8,16], index: 0, kind: input, shape index: {}]
  %s1 = inlined_call_operand.vmem [shape: bf16[16,256], index: 1, kind: input, shape index: {}]
  %s2 = inlined_call_operand.vmem [shape: f32[1,16], index: 2, kind: input, shape index: {}]
  %s3 = inlined_call_operand.vmem [shape: f32[1,128], index: 3, kind: input, shape index: {}]
  %s4 = inlined_call_operand.hbm [shape: f32[8,128], index: 4, kind: output, shape index: {0}]
  %s5 = inlined_call_operand.hbm [shape: f32[1,1], index: 5, kind: output, shape index: {1}]
  %6 = xla_tuple %s4, %s5
  %s7 = sld [smem:[#allocation0]]
  $region42: #{pskip_forward.1} parent=0
    _
  %s9 = ssub.s32 1, %s7
  %s10 = scalar_select 0, %s9, %s7
  $region1: #{pskip_forward.1} parent=0
    #allocation4 [shape = 'u8[4096]{0}', space=vmem, size = 0x1000, scoped, tag = 'output window, operand 0, single buffered']
    #allocation5 [shape = 's32[1]{0}', space=sflag, size = 0x4, scoped, tag = 'scoped memory for pskip_forward.1']
    #allocation6 [shape = 's32[1]{0}', space=sflag, size = 0x4, scoped, tag = 'scoped memory for pskip_forward.1']
    #allocation7 [shape = 'u8[512]{0}', space=smem, size = 0x200, scoped, tag = 'output window, operand 1, single buffered']
    %11 = vsyncpa [#allocation5], 0
    %12 = vsyncpa [#allocation6], 0
    // Predicated region
    $region2: #{pskip_forward.1} parent=1 // pred_check
      _
    $region3: #{pskip_forward.1} parent=1 // pred_check_branch
      %14 = sbr.rel (0) target = $region5
    $region4: #{pskip_forward.1} parent=1 // pred_region
      _
    $region5: #{pskip_forward.1} parent=1 // pred_fallthru
      _
    // Predicated region
    $region6: #{pskip_forward.1} parent=1 // pred_check
      _
    $region7: #{pskip_forward.1} parent=1 // pred_check_branch
      %16 = sbr.rel (0) target = $region9
    $region8: #{pskip_forward.1} parent=1 // pred_region
      _
    $region9: #{pskip_forward.1} parent=1 // pred_fallthru
      _
    // Predicated region
    $region10: #{pskip_forward.1} parent=1 // pred_check
      _
    $region11: #{pskip_forward.1} parent=1 // pred_check_branch
      %18 = sbr.rel (0) target = $region13
    $region12: #{pskip_forward.1} parent=1 // pred_region
      _
    $region13: #{pskip_forward.1} parent=1 // pred_fallthru
      _
    // Predicated region
    $region14: #{pskip_forward.1} parent=1 // pred_check
      _
    $region15: #{pskip_forward.1} parent=1 // pred_check_branch
      %20 = sbr.rel (0) target = $region17
    $region16: #{pskip_forward.1} parent=1 // pred_region
      _
    $region17: #{pskip_forward.1} parent=1 // pred_fallthru
      _
    %p22 = scmp.eq.s32.totalorder 0, 0
    // Predicated region
    $region18: #{pskip_forward.1} parent=1 // pred_check
      %p23 = pneg %p22
    $region19: #{pskip_forward.1} parent=1 // pred_check_branch
      %25 = sbr.rel (%p23) target = $region21
    $region20: #{pskip_forward.1} parent=1 // pred_region
      %26 = vst [vmem:[#allocation2] sm:$0xff] 0.0
      %27 = vst [vmem:[#allocation2 + $0x8] sm:$0xff] 0.0
      %s28 = scalar_lea.smem [#allocation3], 0
      %29 = sst [smem:[%s28]] 0.0
    $region21: #{pskip_forward.1} parent=1 // pred_fallthru
      _
    %v30 = vld [vmem:[%s0] sm:$0xf]
    %v31 = vld [vmem:[#allocation2] sm:$0xff]
    %v32 = vld [vmem:[#allocation2 + $0x8] sm:$0xff]
    %v33 = vld [vmem:[%s1] sm:$0xff]
    %v34 = vld [vmem:[%s1 + $0x8] sm:$0xff]
    %v37 = vunpack.c.l.b16 %v33
    %v38 = vunpack.c.h.b16 %v33
    %v39 = vunpack.c.l.b16 %v34
    %v40 = vunpack.c.h.b16 %v34
    %v41 = vpack.c.b16 %v39, %v37
    %v42 = vpack.c.b16 %v40, %v38
    %vm45 = vcmask 130048
    %v47 = vsel %vm45, %v30, 0
    %49 = vmatprep.subr.bf16.mxu0 %v42
    %50 = vmatpush1.bf16.msra.mxu0 %v41
    %51 = vmatprep.subr.bf16.mxu0 0
    %52 = vmatpush1.bf16.msra.mxu0 0
    %53 = vmatprep.subr.bf16.mxu0 0
    %54 = vmatpush1.bf16.msra.mxu0 0
    %55 = vmatprep.subr.bf16.mxu0 0
    %56 = vmatpush1.bf16.msra.mxu0 0
    %57 = vmatprep.subr.bf16.mxu0 0
    %58 = vmatpush1.bf16.msra.mxu0 0
    %59 = vmatprep.subr.bf16.mxu0 0
    %60 = vmatpush1.bf16.msra.mxu0 0
    %61 = vmatprep.subr.bf16.mxu0 0
    %62 = vmatpush1.bf16.msra.mxu0 0
    %63 = vmatprep.subr.bf16.mxu0 0
    %64 = vmatpush1.bf16.msra.mxu0 0
    %65 = vmatprep.subr.bf16.mxu0 0
    %66 = vmatpush1.bf16.msra.mxu0 0
    %67 = vmatprep.subr.bf16.mxu0 0
    %68 = vmatpush1.bf16.msra.mxu0 0
    %69 = vmatprep.subr.bf16.mxu0 0
    %70 = vmatpush1.bf16.msra.mxu0 0
    %71 = vmatprep.subr.bf16.mxu0 0
    %72 = vmatpush1.bf16.msra.mxu0 0
    %73 = vmatprep.subr.bf16.mxu0 0
    %74 = vmatpush1.bf16.msra.mxu0 0
    %75 = vmatprep.subr.bf16.mxu0 0
    %76 = vmatpush1.bf16.msra.mxu0 0
    %77 = vmatprep.subr.bf16.mxu0 0
    %78 = vmatpush1.bf16.msra.mxu0 0
    %79 = vmatprep.subr.bf16.mxu0 0
    %80 = vmatpush1.bf16.msra.mxu0 0
    %81 = vmatprep.mubr.bf16.mxu0 0
    %82 = vmatmul.mubr.bf16.gmra.mrb[0].mxu0 %v47
    %v83 = vpop.f32.mrb[0].mxu0
    %v84 = vadd.f32 0.0, %v83
    %v85 = vpop.f32.mrb[0].mxu0
    %v86 = vadd.f32 0.0, %v85
    %v87 = vpop.f32.mrb[0].mxu0
    %v88 = vpop.f32.mrb[0].mxu0
    %89 = vdwg.mxu0
    %v90 = vadd.f32 %v31, %v84
    %v91 = vadd.f32 %v32, %v86
    %92 = vst [vmem:[#allocation2] sm:$0xff] %v90
    %93 = vst [vmem:[#allocation2 + $0x8] sm:$0xff] %v91
    %v94 = vunpack.c.l.bf16 %v30
    %s95 = sld [smem:[#allocation3]]
    %v96 = vmul.f32 %v94, %v94
    %v97 = vsel %vm45, %v96, 0.0
    %v98 = vrot.slane %v97, 4
    %v99 = vadd.f32 %v97, %v98
    %v100 = vrot.slane %v99, 2
    %v101 = vadd.f32 %v99, %v100
    %v102 = vrot.slane %v101, 1
    %v103 = vadd.f32 %v101, %v102
    %v104 = vld [vmem:[%s2] sm:$0x1]
    %v105 = vmul.f32 %v103, %v104
    %vm106 = vcmask 122880
    %v107 = vsel %vm106, %v105, 0.0
    %108 = vadd.xlane.f32.xlu0 %v107
    %v109 = vpop.xlane.xlu0 %108
    %v110 = vrot.slane %v109, 4
    %v111 = vadd.f32 %v109, %v110
    %v112 = vrot.slane %v111, 2
    %v113 = vadd.f32 %v111, %v112
    %v114 = vrot.slane %v113, 1
    %v115 = vadd.f32 %v113, %v114
    %s116 = vtos %v115
    %s117 = sadd.f32 %s95, %s116
    %s118 = scalar_lea.smem [#allocation3], 0
    %119 = sst [smem:[%s118]] %s117
    // Predicated region
    $region22: #{pskip_forward.1} parent=1 // pred_check
      %p120 = pneg %p22
    $region23: #{pskip_forward.1} parent=1 // pred_check_branch
      %122 = sbr.rel (%p120) target = $region25
    $region24: #{pskip_forward.1} parent=1 // pred_region
      %v123 = vld [vmem:[#allocation2] sm:$0xff]
      %v124 = vld [vmem:[#allocation2 + $0x8] sm:$0xff]
      %125 = vst [vmem:[#allocation4] sm:$0xff] %v123
      %s126 = sld [smem:[#allocation3]]
      %v127 = vld [vmem:[%s3] sm:$0x1]
      %v129 = vlaneseq
      %v130 = vshrl.u32 %v129, 7
      %v131 = vsub.s32 0, %v130
      %v132 = vrot.slane %v127, %v131
      %v134 = vmul.f32 %v132, %v123
      %v135 = vmul.f32 %v124, 2.0
      %v136 = vsub.f32 %v134, %v135
      %v137 = vmul.f32 %v123, %v136
      %138 = vadd.xlane.f32.xlu0 %v137
      %v139 = vpop.xlane.xlu0 %138
      %v140 = vrot.slane %v139, 4
      %v141 = vadd.f32 %v139, %v140
      %v142 = vrot.slane %v141, 2
      %v143 = vadd.f32 %v141, %v142
      %v144 = vrot.slane %v143, 1
      %v145 = vadd.f32 %v143, %v144
      %s146 = vtos %v145
      %s147 = sadd.f32 %s126, %s146
      %s148 = scalar_lea.smem [#allocation7], 0
      %149 = sst [smem:[%s148]] %s147
    $region25: #{pskip_forward.1} parent=1 // pred_fallthru
      _
    // Predicated region
    $region26: #{pskip_forward.1} parent=1 // pred_check
      _
    $region27: #{pskip_forward.1} parent=1 // pred_check_branch
      %151 = sbr.rel (0) target = $region29
    $region28: #{pskip_forward.1} parent=1 // pred_region
      %s153 = ssub.s32 128, 128
      %154 = vsyncadd [#allocation5], %s153
      %s156 = sshll.u32 [#allocation4], 4
      %s157 = int_to_ptr.vmem [resolvable:$true] %s156
      %159 = dma.vmem_to_hbm [thread:$0]  %s157, 128, %s4, [#allocation5]
    $region29: #{pskip_forward.1} parent=1 // pred_fallthru
      _
    // Predicated region
    $region30: #{pskip_forward.1} parent=1 // pred_check
      _
    $region31: #{pskip_forward.1} parent=1 // pred_check_branch
      %161 = sbr.rel (0) target = $region33
    $region32: #{pskip_forward.1} parent=1 // pred_region
      %s163 = ssub.s32 16, 16
      %164 = vsyncadd [#allocation6], %s163
      %167 = dma.smem_to_hbm [#allocation7], 16, %s5, [#allocation6]
    $region33: #{pskip_forward.1} parent=1 // pred_fallthru
      _
    // Predicated region
    $region34: #{pskip_forward.1} parent=1 // pred_check
      _
    $region35: #{pskip_forward.1} parent=1 // pred_check_branch
      %169 = sbr.rel (0) target = $region37
    $region36: #{pskip_forward.1} parent=1 // pred_region
      %170 = dma.done [#allocation5], 128
    $region37: #{pskip_forward.1} parent=1 // pred_fallthru
      _
    // Predicated region
    $region38: #{pskip_forward.1} parent=1 // pred_check
      _
    $region39: #{pskip_forward.1} parent=1 // pred_check_branch
      %172 = sbr.rel (0) target = $region41
    $region40: #{pskip_forward.1} parent=1 // pred_region
      %173 = dma.done [#allocation6], 16
    $region41: #{pskip_forward.1} parent=1 // pred_fallthru
      _
    %174 = sfence
    %175 = vsyncpa [#allocation5], 1
    %176 = vsyncpa [#allocation6], 1

</llo_original>
